<compile_context>
chip_gen: v7x
topology: tpu7x:2x2x1
jax: 0.10.0
libtpu: 0.0.40
codegen_flags: <defaults>
</compile_context>

<pallas_src>
import functools
import math

import jax
import jax.numpy as jnp
from jax.experimental import pallas as pl
from jax.experimental.pallas import tpu as pltpu


def _layernorm_kernel(x_ref, a_ref, b_ref, o_ref, *, eps, n_features):
    x = x_ref[...].astype(jnp.float32)            # (tile_rows, F)
    a = a_ref[...].astype(jnp.float32)            # (1, F)
    b = b_ref[...].astype(jnp.float32)            # (1, F)

    inv_n = jnp.float32(1.0 / n_features)
    s1 = jnp.sum(x, axis=-1, keepdims=True)       # sum(x)
    s2 = jnp.sum(x * x, axis=-1, keepdims=True)   # sum(x^2) -- single pass
    mean = s1 * inv_n

    # torch.std defaults to the unbiased estimator (divide by N-1).
    # For n_features == 1 torch.std returns NaN; mirror that explicitly.
    unbias = (n_features / (n_features - 1.0)) if n_features > 1 else float("nan")
    var = (s2 * inv_n - mean * mean) * jnp.float32(unbias)
    # Guard tiny negative values from cancellation (f32 accumulation).
    var = jnp.maximum(var, jnp.float32(0.0))
    std = jnp.sqrt(var)

    # Per-row reciprocal on the EUP (free bundle slot), refined with one
    # Newton-Raphson step so f32 accuracy is preserved; the per-element work
    # is then pure VPU multiply/add.
    denom = std + jnp.float32(eps)
    inv = pl.reciprocal(denom, approx=True)
    inv = inv * (jnp.float32(2.0) - denom * inv)

    o_ref[...] = (((x - mean) * inv) * a + b).astype(o_ref.dtype)


def _legalize_tile_rows(t, rows):
    """Tile rows must be a multiple of 8 (or equal the full row extent)."""
    if rows <= 8:
        return rows
    t = max(8, min(int(t), rows))
    return (t // 8) * 8


def layer_norm(x, a_2, b_2, eps=1e-6, *, block_rows=None):
    """LayerNorm over the last axis of x. a_2/b_2 have shape (features,)."""
    orig_shape = x.shape
    features = orig_shape[-1]
    rows = math.prod(orig_shape[:-1]) if len(orig_shape) > 1 else 1

    x2 = x.reshape(rows, features)
    a2 = a_2.reshape(1, features)
    b2 = b_2.reshape(1, features)

    itemsize = jnp.dtype(x.dtype).itemsize

    # --- VMEM capacity (per-generation headroom) -----------------------------
    try:
        vmem_cap = int(pltpu.get_tpu_info().vmem_capacity_bytes)
    except Exception:
        vmem_cap = 64 * 1024 * 1024                 # conservative (v7x per-TC)
    vmem_cap_limit = (vmem_cap * 3) // 4             # leave Mosaic headroom

    # --- row tiling (bytes-targeted) -----------------------------------------
    # Per-row VMEM footprint: double-buffered in + out (I/O dtype) plus ~3
    # tile-sized f32 intermediates (x_f32, x*x / centered, out).
    per_row_vmem = features * (4 * itemsize + 3 * 4)
    vmem_tile_budget = min(24 * 1024 * 1024, vmem_cap // 3)
    tile_by_vmem = max(8, vmem_tile_budget // per_row_vmem)

    # Target ~8 MiB of streamed input data per block (keeps the DMA in the
    # high-efficiency regime and amortizes the ~0.35 us/grid-step overhead).
    target_block_bytes = 8 * 1024 * 1024
    tile_by_target = max(8, target_block_bytes // (features * itemsize))

    tile_rows = min(tile_by_vmem, tile_by_target)

    # Keep at least ~4 grid steps when possible so dimension_semantics
    # ("parallel",) can shard rows across both TensorCores on v7x.
    min_steps = 4
    step_cap = ((pl.cdiv(rows, min_steps) + 7) // 8) * 8
    tile_rows = min(tile_rows, max(8, step_cap))

    if block_rows is not None:
        tile_rows = block_rows                       # test/tuning override
    tile_rows = _legalize_tile_rows(tile_rows, rows)

    grid = (pl.cdiv(rows, tile_rows),)               # partial last block is masked

    # --- scoped VMEM limit ----------------------------------------------------
    block_io_bytes = tile_rows * features * itemsize
    block_f32_bytes = tile_rows * features * 4
    vmem_needed = 4 * block_io_bytes + 3 * block_f32_bytes + 4 * 1024 * 1024
    vmem_limit = int(min(vmem_cap_limit, max(16 * 1024 * 1024, vmem_needed)))

    cost = pl.CostEstimate(
        flops=int(6 * rows * features),
        transcendentals=int(2 * rows),
        bytes_accessed=int(2 * rows * features * itemsize + 2 * features * itemsize),
    )

    out = pl.pallas_call(
        functools.partial(_layernorm_kernel, eps=float(eps), n_features=features),
        out_shape=jax.ShapeDtypeStruct((rows, features), x.dtype),
        grid_spec=pltpu.PrefetchScalarGridSpec(
            num_scalar_prefetch=0,
            grid=grid,
            in_specs=[
                pl.BlockSpec((tile_rows, features), lambda i: (i, 0)),
                pl.BlockSpec((1, features), lambda i: (0, 0)),
                pl.BlockSpec((1, features), lambda i: (0, 0)),
            ],
            out_specs=pl.BlockSpec((tile_rows, features), lambda i: (i, 0)),
        ),
        compiler_params=pltpu.CompilerParams(
            dimension_semantics=("parallel",),
            vmem_limit_bytes=vmem_limit,
        ),
        cost_estimate=cost,
    )(x2, a2, b2)

    return out.reshape(orig_shape)


def _reference_layer_norm(x, a_2, b_2, eps=1e-6):
    """Pure-JAX reference matching the PyTorch forward (unbiased std)."""
    mean = jnp.mean(x, axis=-1, keepdims=True)
    var = jnp.sum((x - mean) ** 2, axis=-1, keepdims=True) / (x.shape[-1] - 1)
    std = jnp.sqrt(var)
    return a_2 * (x - mean) / (std + eps) + b_2


if __name__ == "__main__":
    key = jax.random.PRNGKey(0)

    # Test 1: module-consistent small shape (batch=2, seq=8, hidden=32).
    batch, seq, features = 2, 8, 32
    x = jax.random.normal(key, (batch, seq, features), dtype=jnp.float32)
    a_2 = jnp.ones((features,), dtype=jnp.float32)   # nn.Parameter(torch.ones)
    b_2 = jnp.zeros((features,), dtype=jnp.float32)  # nn.Parameter(torch.zeros)

    out = layer_norm(x, a_2, b_2, eps=1e-6)
    out = jax.block_until_ready(out)
    ref = _reference_layer_norm(x, a_2, b_2, eps=1e-6)
    assert out.shape == x.shape and out.dtype == x.dtype
    assert jnp.allclose(out, ref, atol=2e-5, rtol=2e-5)

    # Test 2: non-128-multiple feature size (96) handled WITHOUT padding
    # (full-extent feature block, masked stores), plus a partial last row
    # block (rows=150 with a forced 64-row tile -> grid of 3, last block short).
    k2, k3, k4 = jax.random.split(jax.random.PRNGKey(0), 3)
    b2_, s2_, f2_ = 3, 50, 96
    x2 = jax.random.normal(k2, (b2_, s2_, f2_), dtype=jnp.float32)
    a2 = 1.0 + 0.1 * jax.random.normal(k3, (f2_,), dtype=jnp.float32)
    bb2 = 0.1 * jax.random.normal(k4, (f2_,), dtype=jnp.float32)
    out2 = jax.block_until_ready(layer_norm(x2, a2, bb2, eps=1e-6, block_rows=64))
    ref2 = _reference_layer_norm(x2, a2, bb2, eps=1e-6)
    assert out2.shape == x2.shape
    assert jnp.allclose(out2, ref2, atol=2e-5, rtol=2e-5)

    # Test 3: auto-tiled path with bf16 input (exercises f32-intermediate
    # VMEM accounting and the >=4 grid-step megacore split).
    x3 = jax.random.normal(jax.random.PRNGKey(7), (4, 64, 256), dtype=jnp.bfloat16)
    a3 = jnp.ones((256,), dtype=jnp.bfloat16)
    b3 = jnp.zeros((256,), dtype=jnp.bfloat16)
    out3 = jax.block_until_ready(layer_norm(x3, a3, b3, eps=1e-6))
    ref3 = _reference_layer_norm(x3.astype(jnp.float32),
                                 a3.astype(jnp.float32),
                                 b3.astype(jnp.float32), eps=1e-6)
    assert out3.shape == x3.shape and out3.dtype == x3.dtype
    assert jnp.allclose(out3.astype(jnp.float32), ref3, atol=2e-2, rtol=2e-2)

    print("KERNEL_OK")
</pallas_src>

<mosaic_0001>
module attributes {stable_mosaic.version = 11 : i64} {
  func.func @_layernorm_kernel(%arg0: i32, %arg1: memref<8x32xf32, #tpu.memory_space<vmem>>, %arg2: memref<1x32xf32, #tpu.memory_space<vmem>>, %arg3: memref<1x32xf32, #tpu.memory_space<vmem>>, %arg4: memref<8x32xf32, #tpu.memory_space<vmem>>) attributes {dimension_semantics = [#tpu.dimension_semantics<parallel>], iteration_bounds = array<i64: 2>, scalar_prefetch = 0 : i64, scratch_operands = 0 : i64, tpu.core_type = #tpu.core_type<tc>, window_params = [{transform_indices = @transform_0, window_bounds = array<i64: 8, 32>}, {pipeline_mode = #tpu.pipeline_mode<synchronous>, transform_indices = @transform_1, window_bounds = array<i64: 1, 32>}, {pipeline_mode = #tpu.pipeline_mode<synchronous>, transform_indices = @transform_2, window_bounds = array<i64: 1, 32>}, {transform_indices = @transform_3, window_bounds = array<i64: 8, 32>}]} {
    %c0 = arith.constant 0 : index
    %c0_0 = arith.constant 0 : index
    %0 = vector.load %arg1[%c0, %c0_0] : memref<8x32xf32, #tpu.memory_space<vmem>>, vector<8x32xf32>
    %c0_1 = arith.constant 0 : index
    %c0_2 = arith.constant 0 : index
    %1 = vector.load %arg2[%c0_1, %c0_2] : memref<1x32xf32, #tpu.memory_space<vmem>>, vector<1x32xf32>
    %c0_3 = arith.constant 0 : index
    %c0_4 = arith.constant 0 : index
    %2 = vector.load %arg3[%c0_3, %c0_4] : memref<1x32xf32, #tpu.memory_space<vmem>>, vector<1x32xf32>
    %cst = arith.constant dense<0.000000e+00> : vector<8xf32>
    %3 = vector.multi_reduction <add>, %0, %cst [1] : vector<8x32xf32> to vector<8xf32>
    %4 = vector.shape_cast %3 : vector<8xf32> to vector<8x1xf32>
    %5 = arith.mulf %0, %0 : vector<8x32xf32>
    %cst_5 = arith.constant dense<0.000000e+00> : vector<8xf32>
    %6 = vector.multi_reduction <add>, %5, %cst_5 [1] : vector<8x32xf32> to vector<8xf32>
    %7 = vector.shape_cast %6 : vector<8xf32> to vector<8x1xf32>
    %cst_6 = arith.constant 3.125000e-02 : f32
    %8 = vector.broadcast %cst_6 : f32 to vector<8x1xf32>
    %9 = arith.mulf %4, %8 : vector<8x1xf32>
    %cst_7 = arith.constant 3.125000e-02 : f32
    %10 = vector.broadcast %cst_7 : f32 to vector<8x1xf32>
    %11 = arith.mulf %7, %10 : vector<8x1xf32>
    %12 = arith.mulf %9, %9 : vector<8x1xf32>
    %13 = arith.subf %11, %12 : vector<8x1xf32>
    %cst_8 = arith.constant 1.03225803 : f32
    %14 = vector.broadcast %cst_8 : f32 to vector<8x1xf32>
    %15 = arith.mulf %13, %14 : vector<8x1xf32>
    %cst_9 = arith.constant 0.000000e+00 : f32
    %16 = vector.broadcast %cst_9 : f32 to vector<8x1xf32>
    %17 = arith.maximumf %15, %16 : vector<8x1xf32>
    %18 = math.sqrt %17 : vector<8x1xf32>
    %cst_10 = arith.constant 9.99999997E-7 : f32
    %19 = vector.broadcast %cst_10 : f32 to vector<8x1xf32>
    %20 = arith.addf %18, %19 : vector<8x1xf32>
    %21 = tpu.reciprocal %20 {approx = true} : vector<8x1xf32> -> vector<8x1xf32>
    %22 = arith.mulf %20, %21 : vector<8x1xf32>
    %cst_11 = arith.constant 2.000000e+00 : f32
    %23 = vector.broadcast %cst_11 : f32 to vector<8x1xf32>
    %24 = arith.subf %23, %22 : vector<8x1xf32>
    %25 = arith.mulf %21, %24 : vector<8x1xf32>
    %26 = vector.broadcast %9 : vector<8x1xf32> to vector<8x32xf32>
    %27 = arith.subf %0, %26 : vector<8x32xf32>
    %28 = vector.broadcast %25 : vector<8x1xf32> to vector<8x32xf32>
    %29 = arith.mulf %27, %28 : vector<8x32xf32>
    %30 = vector.broadcast %1 : vector<1x32xf32> to vector<8x32xf32>
    %31 = arith.mulf %29, %30 : vector<8x32xf32>
    %32 = vector.broadcast %2 : vector<1x32xf32> to vector<8x32xf32>
    %33 = arith.addf %31, %32 : vector<8x32xf32>
    %c0_12 = arith.constant 0 : index
    %c0_13 = arith.constant 0 : index
    %34 = vector.load %arg4[%c0_12, %c0_13] : memref<8x32xf32, #tpu.memory_space<vmem>>, vector<8x32xf32>
    tpu.vector_store %arg4[%c0_12, %c0_13], %33 {strides = array<i32>} : memref<8x32xf32, #tpu.memory_space<vmem>>, vector<8x32xf32>,
    return
  }
  func.func @transform_0(%arg0: i32) -> (i32, i32) {
    %c0_i32 = arith.constant 0 : i32
    %c0_i32_0 = arith.constant 0 : i32
    return %arg0, %c0_i32 : i32, i32
  }
  func.func @transform_1(%arg0: i32) -> (i32, i32) {
    %c0_i32 = arith.constant 0 : i32
    %c0_i32_0 = arith.constant 0 : i32
    %c0_i32_1 = arith.constant 0 : i32
    return %c0_i32, %c0_i32_0 : i32, i32
  }
  func.func @transform_2(%arg0: i32) -> (i32, i32) {
    %c0_i32 = arith.constant 0 : i32
    %c0_i32_0 = arith.constant 0 : i32
    %c0_i32_1 = arith.constant 0 : i32
    return %c0_i32, %c0_i32_0 : i32, i32
  }
  func.func @transform_3(%arg0: i32) -> (i32, i32) {
    %c0_i32 = arith.constant 0 : i32
    %c0_i32_0 = arith.constant 0 : i32
    return %arg0, %c0_i32 : i32, i32
  }
}

</mosaic_0001>

<llo_original>
// kernel: tpu_custom_call.1
$region0: #{tpu_custom_call.1}
  #allocation0 [shape = 'u32[]', space=smem, size = 0x4, offset = 0x4, fixed_abs, tag = 'smem constant byte address 0x4 - core index']
  #allocation1 [shape = 'u32[144,128]{1,0:T(1,128)}', space=vmem, size = 0x12000, scoped, tag = 'internal scratch']
  %s0 = inlined_call_operand.hbm [shape: f32[16,32], index: 0, kind: input, shape index: {}]
  %s1 = inlined_call_operand.vmem [shape: f32[1,32], index: 1, kind: input, shape index: {}]
  %s2 = inlined_call_operand.vmem [shape: f32[1,32], index: 2, kind: input, shape index: {}]
  %s3 = inlined_call_operand.hbm [shape: f32[16,32], index: 3, kind: output, shape index: {}]
  %s4 = sld [smem:[#allocation0]]
  $region49: #{tpu_custom_call.1} parent=0
    _
  %s6 = ssub.s32 1, %s4
  %s7 = scalar_select 0, %s6, %s4
  $region1: #{tpu_custom_call.1} parent=0
    #allocation2 [shape = 'u8[8192]{0}', space=vmem, size = 0x2000, scoped, tag = 'input window, operand 0']
    #allocation3 [shape = 's32[2]{0}', space=sflag, size = 0x8, scoped, tag = 'scoped memory for tpu_custom_call.1']
    #allocation4 [shape = 's32[2]{0}', space=sflag, size = 0x8, scoped, tag = 'scoped memory for tpu_custom_call.1']
    #allocation5 [shape = 'u8[8192]{0}', space=vmem, size = 0x2000, scoped, tag = 'output window, operand 0']
    %8 = vsyncpa [#allocation3], 0
    %s9 = scalar_lea.sflag [#allocation3], 1
    %10 = vsyncpa %s9, 0
    %11 = vsyncpa [#allocation4], 0
    %s12 = scalar_lea.sflag [#allocation4], 1
    %13 = vsyncpa %s12, 0
    loop: start=0, step=1, limit=4
    $region2: #{tpu_custom_call.1} parent=1 // loop_pre_header
      _
    $region3: #{tpu_custom_call.1} parent=1 // loop_header
      %s15 = sphi 0, %s19
      %p16 = scmp.ge.s32.totalorder %s15, 4
      %s25 = sphi 0, %s27
      %s28 = sphi 0, %s25
      %s29 = sphi 0, %s28
      %s45 = sphi 0, %s29
      %s49 = sphi 0, %s49
      %s51 = sphi 0, %s49
      %s52 = sphi 0, %s51
      %s66 = sphi 0, %s52
      %s70 = sphi 0, %s70
      %s72 = sphi 0, %s70
      %s73 = sphi 0, %s72
      %s87 = sphi 0, %s73
      %s93 = sphi 0, %s95
      %s96 = sphi 0, %s93
      %s97 = sphi 0, %s96
      %s113 = sphi 0, %s97
    $region4: #{tpu_custom_call.1} parent=1 // loop_header_branch
      %18 = sbr.rel (%p16) target = $region8
    $region5: #{tpu_custom_call.1} parent=1 // loop_body
      %s20 = ssub.s32 %s15, 1
      %s21 = ssub.s32 %s15, 2
      %s22 = sadd.s32 %s15, 1
      %s23 = ssub.s32 %s15, %s22
      %p24 = scmp.eq.s32.totalorder %s23, 0
      %s26 = sadd.s32 %s25, 1
      %s27 = scalar_select %p24, %s25, %s26
      %p30 = pneg %p24
      %p31 = scmp.eq.s32.totalorder %s15, 1
      %p32 = por %p30, %p31
      %p33 = scmp.ne.s32.totalorder %s25, %s28
      %p34 = scmp.eq.s32.totalorder %s15, 0
      %p35 = por %p33, %p34
      %p36 = scmp.ne.s32.totalorder %s25, %s28
      %p37 = scmp.eq.s32.totalorder %s20, 1
      %p38 = por %p36, %p37
      %p39 = scmp.ne.s32.totalorder %s28, %s29
      %p40 = scmp.eq.s32.totalorder %s20, 0
      %p41 = por %p39, %p40
      %p42 = scmp.ne.s32.totalorder %s28, %s29
      %p43 = scmp.eq.s32.totalorder %s21, 1
      %p44 = por %p42, %p43
      %p46 = scmp.ne.s32.totalorder %s29, %s45
      %p47 = scmp.eq.s32.totalorder %s21, 0
      %p48 = por %p46, %p47
      %s50 = sadd.s32 %s49, 1
      %p53 = scmp.eq.s32.totalorder %s15, 1
      %p54 = scmp.ne.s32.totalorder %s49, %s51
      %p55 = scmp.eq.s32.totalorder %s15, 0
      %p56 = por %p54, %p55
      %p57 = scmp.ne.s32.totalorder %s49, %s51
      %p58 = scmp.eq.s32.totalorder %s20, 1
      %p59 = por %p57, %p58
      %p60 = scmp.ne.s32.totalorder %s51, %s52
      %p61 = scmp.eq.s32.totalorder %s20, 0
      %p62 = por %p60, %p61
      %p63 = scmp.ne.s32.totalorder %s51, %s52
      %p64 = scmp.eq.s32.totalorder %s21, 1
      %p65 = por %p63, %p64
      %p67 = scmp.ne.s32.totalorder %s52, %s66
      %p68 = scmp.eq.s32.totalorder %s21, 0
      %p69 = por %p67, %p68
      %s71 = sadd.s32 %s70, 1
      %p74 = scmp.eq.s32.totalorder %s15, 1
      %p75 = scmp.ne.s32.totalorder %s70, %s72
      %p76 = scmp.eq.s32.totalorder %s15, 0
      %p77 = por %p75, %p76
      %p78 = scmp.ne.s32.totalorder %s70, %s72
      %p79 = scmp.eq.s32.totalorder %s20, 1
      %p80 = por %p78, %p79
      %p81 = scmp.ne.s32.totalorder %s72, %s73
      %p82 = scmp.eq.s32.totalorder %s20, 0
      %p83 = por %p81, %p82
      %p84 = scmp.ne.s32.totalorder %s72, %s73
      %p85 = scmp.eq.s32.totalorder %s21, 1
      %p86 = por %p84, %p85
      %p88 = scmp.ne.s32.totalorder %s73, %s87
      %p89 = scmp.eq.s32.totalorder %s21, 0
      %p90 = por %p88, %p89
      %s91 = ssub.s32 %s15, %s22
      %p92 = scmp.eq.s32.totalorder %s91, 0
      %s94 = sadd.s32 %s93, 1
      %s95 = scalar_select %p92, %s93, %s94
      %p98 = pneg %p92
      %p99 = scmp.eq.s32.totalorder %s15, 1
      %p100 = por %p98, %p99
      %p101 = scmp.ne.s32.totalorder %s93, %s96
      %p102 = scmp.eq.s32.totalorder %s15, 0
      %p103 = por %p101, %p102
      %p104 = scmp.ne.s32.totalorder %s93, %s96
      %p105 = scmp.eq.s32.totalorder %s20, 1
      %p106 = por %p104, %p105
      %p107 = scmp.ne.s32.totalorder %s96, %s97
      %p108 = scmp.eq.s32.totalorder %s20, 0
      %p109 = por %p107, %p108
      %p110 = scmp.ne.s32.totalorder %s96, %s97
      %p111 = scmp.eq.s32.totalorder %s21, 1
      %p112 = por %p110, %p111
      %p114 = scmp.ne.s32.totalorder %s97, %s113
      %p115 = scmp.eq.s32.totalorder %s21, 0
      %p116 = por %p114, %p115
      %p117 = scmp.le.s32.totalorder 1, %s15
      %p118 = scmp.lt.s32.totalorder %s15, 3
      %p119 = pnand %p117, %p118
      %p120 = pneg %p119
      // Predicated region
      $region9: #{tpu_custom_call.1} parent=5 // pred_check
        _
      $region10: #{tpu_custom_call.1} parent=5 // pred_check_branch
        %122 = sbr.rel (%p119) target = $region12
      $region11: #{tpu_custom_call.1} parent=5 // pred_region
        %s123 = ssub.s32 %s15, 1
        // Predicated region
        $region13: #{tpu_custom_call.1} parent=11 // pred_check
          %p124 = pneg %p62
        $region14: #{tpu_custom_call.1} parent=11 // pred_check_branch
          %126 = sbr.rel (%p124) target = $region16
        $region15: #{tpu_custom_call.1} parent=11 // pred_region
          _
        $region16: #{tpu_custom_call.1} parent=11 // pred_fallthru
          _
        // Predicated region
        $region17: #{tpu_custom_call.1} parent=11 // pred_check
          %p127 = pneg %p83
        $region18: #{tpu_custom_call.1} parent=11 // pred_check_branch
          %129 = sbr.rel (%p127) target = $region20
        $region19: #{tpu_custom_call.1} parent=11 // pred_region
          _
        $region20: #{tpu_custom_call.1} parent=11 // pred_fallthru
          _
      $region12: #{tpu_custom_call.1} parent=5 // pred_fallthru
        _
      %p130 = scmp.lt.s32.totalorder %s15, 2
      // Predicated region
      $region21: #{tpu_custom_call.1} parent=5 // pred_check
        %p131 = pneg %p130
      $region22: #{tpu_custom_call.1} parent=5 // pred_check_branch
        %133 = sbr.rel (%p131) target = $region24
      $region23: #{tpu_custom_call.1} parent=5 // pred_region
        // Predicated region
        $region25: #{tpu_custom_call.1} parent=23 // pred_check
          %p134 = pneg %p35
        $region26: #{tpu_custom_call.1} parent=23 // pred_check_branch
          %136 = sbr.rel (%p134) target = $region28
        $region27: #{tpu_custom_call.1} parent=23 // pred_region
          %s137 = sand.u32 %s25, 1
          %s138 = scalar_lea.sflag [#allocation3], %s137
          %s139 = sand.u32 %s25, 1
          %s140 = smul.addr %s139, 8
          %s141 = scalar_lea.vmem [#allocation2], %s140
          %s143 = ssub.s32 128, 128
          %144 = vsyncadd %s138, %s143
          %s145 = smul.addr %s15, 128
          %s146 = scalar_lea.hbm %s0, %s145
          %s148 = sshll.u32 %s141, 4
          %s149 = int_to_ptr.vmem [resolvable:$true] %s148
          %151 = dma.hbm_to_vmem [thread:$0]  %s146, 128, %s149, %s138
        $region28: #{tpu_custom_call.1} parent=23 // pred_fallthru
          _
      $region24: #{tpu_custom_call.1} parent=5 // pred_fallthru
        _
      %p152 = scmp.le.s32.totalorder 1, %s15
      %p153 = scmp.lt.s32.totalorder %s15, 3
      %p154 = pnand %p152, %p153
      %p155 = pneg %p154
      // Predicated region
      $region29: #{tpu_custom_call.1} parent=5 // pred_check
        _
      $region30: #{tpu_custom_call.1} parent=5 // pred_check_branch
        %157 = sbr.rel (%p154) target = $region32
      $region31: #{tpu_custom_call.1} parent=5 // pred_region
        %s158 = ssub.s32 %s15, 1
        %s159 = sand.u32 %s28, 1
        %s160 = scalar_lea.sflag [#allocation3], %s159
        %s161 = sand.u32 %s28, 1
        %s162 = smul.addr %s161, 8
        %s163 = scalar_lea.vmem [#allocation2], %s162
        // Predicated region
        $region33: #{tpu_custom_call.1} parent=31 // pred_check
          %p164 = pneg %p41
        $region34: #{tpu_custom_call.1} parent=31 // pred_check_branch
          %166 = sbr.rel (%p164) target = $region36
        $region35: #{tpu_custom_call.1} parent=31 // pred_region
          %167 = dma.done %s160, 128
        $region36: #{tpu_custom_call.1} parent=31 // pred_fallthru
          _
        %s168 = sand.u32 %s28, 1
        %s169 = scalar_lea.sflag [#allocation3], %s168
        %s170 = sand.u32 %s28, 1
        %s171 = smul.addr %s170, 8
        %s172 = scalar_lea.vmem [#allocation2], %s171
        %p173 = pneg %p41
        %p174 = pneg %p38
        %p175 = pneg %p62
        %p176 = pneg %p59
        %p177 = pneg %p83
        %p178 = pneg %p80
        %p179 = pneg %p109
        %p180 = pneg %p106
        %s181 = sand.u32 %s96, 1
        %s182 = scalar_lea.sflag [#allocation4], %s181
        %s183 = sand.u32 %s96, 1
        %s184 = smul.addr %s183, 8
        %s185 = scalar_lea.vmem [#allocation5], %s184
        %v186 = vld [vmem:[%s163] sm:$0xff]
        %v187 = vld [vmem:[%s1] sm:$0x1]
        %v188 = vld [vmem:[%s2] sm:$0x1]
        %vm189 = vcmask 261120
        %v190 = vsel %vm189, %v186, 0.0
        %191 = vadd.xlane.f32.xlu0 %v190
        %v192 = vpop.xlane.xlu0 %191
        %v193 = vmul.f32 %v186, %v186
        %v194 = vsel %vm189, %v193, 0.0
        %195 = vadd.xlane.f32.xlu0 %v194
        %v196 = vpop.xlane.xlu0 %195
        %v197 = vmul.f32 %v192, 0.03125
        %v198 = vmul.f32 %v196, 0.03125
        %v199 = vmul.f32 %v197, %v197
        %v200 = vsub.f32 %v198, %v199
        %v201 = vmul.f32 %v200, 1.032258
        %v202 = vmax.f32 %v201, 0.0
        %v203 = vrsqrt.pop %v202
        %v204 = vmul.f32 %v202, %v203
        %vm205 = vcmp.eq.f32.partialorder %v202, inf
        %v206 = vsel %vm205, %v202, %v204
        %vm207 = vcmp.eq.f32.partialorder %v202, 0.0
        %v208 = vand.u32 %v202, 2147483648
        %v209 = vsel %vm207, %v208, %v206
        %v210 = vadd.f32 %v209, 1e-06
        %v211 = vrcp.pop %v210
        %v212 = vmul.f32 %v210, %v211
        %v213 = vsub.f32 2.0, %v212
        %v214 = vmul.f32 %v211, %v213
        %v215 = vsub.f32 %v186, %v197
        %v216 = vmul.f32 %v215, %v214
        %v218 = vlaneseq
        %v219 = vshrl.u32 %v218, 7
        %v220 = vsub.s32 0, %v219
        %v221 = vrot.slane %v187, %v220
        %v223 = vmul.f32 %v216, %v221
        %v225 = vlaneseq
        %v226 = vshrl.u32 %v225, 7
        %v227 = vsub.s32 0, %v226
        %v228 = vrot.slane %v188, %v227
        %v230 = vadd.f32 %v223, %v228
        %231 = vst.msk [vmem:[%s185] sm:$0xff] %vm189, %v230
        %s232 = sand.u32 %s96, 1
        %s233 = scalar_lea.sflag [#allocation4], %s232
        %s234 = sand.u32 %s96, 1
        %s235 = smul.addr %s234, 8
        %s236 = scalar_lea.vmem [#allocation5], %s235
        // Predicated region
        $region37: #{tpu_custom_call.1} parent=31 // pred_check
          %p237 = pneg %p106
        $region38: #{tpu_custom_call.1} parent=31 // pred_check_branch
          %239 = sbr.rel (%p237) target = $region40
        $region39: #{tpu_custom_call.1} parent=31 // pred_region
          %s241 = ssub.s32 128, 128
          %242 = vsyncadd %s233, %s241
          %s243 = smul.addr %s20, 128
          %s244 = scalar_lea.hbm %s3, %s243
          %s246 = sshll.u32 %s236, 4
          %s247 = int_to_ptr.vmem [resolvable:$true] %s246
          %249 = dma.vmem_to_hbm [thread:$0]  %s247, 128, %s244, %s233
        $region40: #{tpu_custom_call.1} parent=31 // pred_fallthru
          _
      $region32: #{tpu_custom_call.1} parent=5 // pred_fallthru
        _
      %p250 = scmp.le.s32.totalorder 2, %s15
      // Predicated region
      $region41: #{tpu_custom_call.1} parent=5 // pred_check
        %p251 = pneg %p250
      $region42: #{tpu_custom_call.1} parent=5 // pred_check_branch
        %253 = sbr.rel (%p251) target = $region44
      $region43: #{tpu_custom_call.1} parent=5 // pred_region
        %s254 = ssub.s32 %s15, 2
        // Predicated region
        $region45: #{tpu_custom_call.1} parent=43 // pred_check
          %p255 = pneg %p112
        $region46: #{tpu_custom_call.1} parent=43 // pred_check_branch
          %257 = sbr.rel (%p255) target = $region48
        $region47: #{tpu_custom_call.1} parent=43 // pred_region
          %s258 = sand.u32 %s97, 1
          %s259 = scalar_lea.sflag [#allocation4], %s258
          %s260 = sand.u32 %s97, 1
          %s261 = smul.addr %s260, 8
          %s262 = scalar_lea.vmem [#allocation5], %s261
          %263 = dma.done %s259, 128
        $region48: #{tpu_custom_call.1} parent=43 // pred_fallthru
          _
      $region44: #{tpu_custom_call.1} parent=5 // pred_fallthru
        _
    $region6: #{tpu_custom_call.1} parent=1 // loop_footer
      %s19 = sadd.s32 1, %s15
    $region7: #{tpu_custom_call.1} parent=1 // loop_footer_branch
      %14 = sbr.rel target = $region3
    $region8: #{tpu_custom_call.1} parent=1 // loop_exit
      _
    %264 = vsyncpa [#allocation3], 1
    %s265 = scalar_lea.sflag [#allocation3], 1
    %266 = vsyncpa %s265, 1
    %267 = vsyncpa [#allocation4], 1
    %s268 = scalar_lea.sflag [#allocation4], 1
    %269 = vsyncpa %s268, 1

</llo_original>
